<compile_context>
chip_gen: v7x
topology: tpu7x:2x2x1
jax: 0.10.0
libtpu: 0.0.40
codegen_flags: <defaults>
</compile_context>

<pallas_src>
import functools

import jax
import jax.numpy as jnp
from jax.experimental import pallas as pl
from jax.experimental.pallas import tpu as pltpu

EPS = 1e-5
LANE = 128


def _round_up(n, m):
    return ((n + m - 1) // m) * m


def _bf16_elementwise_ok():
    """bf16 VALU exists on v6e / v7x; v5e (and older) keep the f32 tail."""
    try:
        kind = jax.devices()[0].device_kind.lower()
    except Exception:
        return False
    return not any(v in kind for v in ("v2", "v3", "v4", "v5"))


def _vmem_limit_bytes():
    """Generation-aware scoped-VMEM limit (v7x has only 64 MiB per TC)."""
    try:
        cap = pltpu.get_tpu_info().vmem_capacity_bytes
        return int(min(cap // 2, 64 * 1024 * 1024))
    except Exception:
        return 32 * 1024 * 1024


def _dense_bn_relu(h, w, gb, bf16_tail):
    # Linear (bf16 MXU matmul, f32 accumulation).  Hidden-layer bias omitted:
    # it is constant over the batch and cancels exactly in BN's batch-mean
    # subtraction (training-mode statistics).
    y = jnp.dot(h, w, preferred_element_type=jnp.float32)
    # BatchNorm1d training-mode stats: per-batch mean / biased variance (f32).
    mean = jnp.mean(y, axis=0, keepdims=True)
    var = jnp.maximum(jnp.mean(y * y, axis=0, keepdims=True) - mean * mean, 0.0)
    inv = jax.lax.rsqrt(var + EPS)
    gamma = gb[0:1, :]
    beta = gb[1:2, :]
    if bf16_tail:
        # v6e/v7x: bulk elementwise work in bf16 (half the vreg bytes, merges
        # the downcast into the BN apply).  Center in f32 first so the
        # 1/std-amplified cancellation stays accurate.
        yc = (y - mean).astype(jnp.bfloat16)
        scale = (gamma * inv).astype(jnp.bfloat16)
        shift = beta.astype(jnp.bfloat16)
        return jnp.maximum(yc * scale + shift, 0.0)
    # v5e (no bf16 VPU/EUP): fold BN into one f32 scale + shift, then downcast.
    scale = gamma * inv
    shift = beta - mean * scale
    return jnp.maximum(y * scale + shift, 0.0).astype(jnp.bfloat16)


def mlp_kernel(*refs, n_hidden, bf16_tail):
    x_ref, out_ref = refs[0], refs[-1]
    # Cast the activation input inside the kernel (no per-call XLA cast op).
    h = x_ref[...].astype(jnp.bfloat16)
    for i in range(n_hidden):
        h = _dense_bn_relu(h, refs[1 + 2 * i][...], refs[2 + 2 * i][...],
                           bf16_tail)
    # Final Linear.  The bias is folded in as a "bias row" of the padded W5
    # multiplying the constant-1 column manufactured in the last hidden
    # layer's padding, so this is a single MXU op.  Output is a lane-dense
    # 128-wide slab -> unmasked full-lane stores.
    out_ref[...] = jnp.dot(h, refs[1 + 2 * n_hidden][...],
                           preferred_element_type=jnp.float32)


def prepare_params(params, input_dim, hidden_dims, output_dim):
    """One-time repack of the PyTorch-style parameter list into lean, padded
    kernel operands (hoisted out of the jitted hot path)."""
    n_hidden = len(hidden_dims)
    ops = []
    idx = 0
    last_pad = input_dim
    last_true = input_dim
    for li, h in enumerate(hidden_dims):
        w, _b, g, t = params[idx], params[idx + 1], params[idx + 2], params[idx + 3]
        idx += 4
        if li == n_hidden - 1:
            # Guarantee at least one spare lane for the constant-1 bias column.
            hp = _round_up(h + 1, LANE)
        else:
            hp = _round_up(h, LANE)
        wp = jnp.zeros((last_pad, hp), jnp.float32).at[:w.shape[0], :h].set(w)
        gamma = jnp.zeros((1, hp), jnp.float32).at[:, :h].set(g)
        beta = jnp.zeros((1, hp), jnp.float32).at[:, :h].set(t)
        if li == n_hidden - 1:
            beta = beta.at[0, h].set(1.0)   # column h becomes 1 after BN+ReLU
        ops.append(wp.astype(jnp.bfloat16))                 # (in_pad, hp) bf16
        ops.append(jnp.concatenate([gamma, beta], axis=0))  # (2, hp) f32
        last_pad, last_true = hp, h

    w5, b5 = params[idx], params[idx + 1]
    out_pad = _round_up(output_dim, LANE)
    w5p = jnp.zeros((last_pad, out_pad), jnp.float32)
    w5p = w5p.at[:last_true, :output_dim].set(w5)
    w5p = w5p.at[last_true, :output_dim].set(jnp.reshape(b5, (-1,)))  # bias row
    ops.append(w5p.astype(jnp.bfloat16))
    return tuple(ops)


@jax.jit
def mlp_forward(x, packed):
    """Hot path: one fused grid-less Pallas call on pre-packed operands.
    Returns the lane-dense (batch, 128) logits slab; slice at the consumer."""
    batch = x.shape[0]
    out_pad = packed[-1].shape[1]
    n_hidden = (len(packed) - 1) // 2
    kernel = functools.partial(mlp_kernel, n_hidden=n_hidden,
                               bf16_tail=_bf16_elementwise_ok())
    vmem = pl.BlockSpec(memory_space=pltpu.MemorySpace.VMEM)
    return pl.pallas_call(
        kernel,
        out_shape=jax.ShapeDtypeStruct((batch, out_pad), jnp.float32),
        in_specs=[vmem] * (1 + len(packed)),
        out_specs=vmem,
        compiler_params=pltpu.CompilerParams(
            vmem_limit_bytes=_vmem_limit_bytes()),
    )(x, *packed)


def init_params(key, input_dim, hidden_dims, output_dim):
    """PyTorch-equivalent parameters: per Linear (W^T as (in,out), bias), plus
    BatchNorm1d gamma/beta for each hidden layer."""
    params = []
    last = input_dim
    dims = list(hidden_dims) + [output_dim]
    for i, h in enumerate(dims):
        key, kw, kb = jax.random.split(key, 3)
        bound = 1.0 / jnp.sqrt(float(last))
        w = jax.random.uniform(kw, (last, h), jnp.float32, -bound, bound)
        b = jax.random.uniform(kb, (1, h), jnp.float32, -bound, bound)
        params.extend([w, b])
        if i < len(hidden_dims):  # hidden layers carry BatchNorm1d
            params.extend([jnp.ones((1, h), jnp.float32),    # BN weight = 1
                           jnp.zeros((1, h), jnp.float32)])  # BN bias = 0
        last = h
    return params


def mlp_reference(x, params, n_hidden):
    """Pure-JAX f32 reference of the exact module forward (biases included)."""
    h = x
    idx = 0
    for _ in range(n_hidden):
        w, b, g, t = params[idx], params[idx + 1], params[idx + 2], params[idx + 3]
        idx += 4
        y = h @ w + b
        mean = jnp.mean(y, axis=0, keepdims=True)
        var = jnp.mean((y - mean) ** 2, axis=0, keepdims=True)
        h = jnp.maximum(((y - mean) / jnp.sqrt(var + EPS)) * g + t, 0.0)
    w, b = params[idx], params[idx + 1]
    return h @ w + b


if __name__ == "__main__":
    input_dim = 32
    hidden_dims = [256, 128, 128, 64]
    output_dim = 10
    batch = 8

    key = jax.random.PRNGKey(0)
    key, kx = jax.random.split(key)
    x = jax.random.normal(kx, (batch, input_dim), jnp.float32)

    params = init_params(key, input_dim, hidden_dims, output_dim)
    packed = prepare_params(params, input_dim, hidden_dims, output_dim)  # once

    out_slab = mlp_forward(x, packed)           # hot path: single Pallas call
    out_slab = jax.block_until_ready(out_slab)
    out = out_slab[:, :output_dim]              # slice at consumer, off hot path

    ref = mlp_reference(x, params, len(hidden_dims))
    assert out.shape == (batch, output_dim)
    # bf16 matmul operands / bf16 BN tail vs f32 reference -> ~1e-2 deviation.
    assert jnp.allclose(out, ref, atol=5e-2, rtol=5e-2), "mismatch vs reference"

    print("KERNEL_OK")
</pallas_src>

<mosaic_0001>
module attributes {stable_mosaic.version = 11 : i64} {
  func.func @mlp_kernel(%arg0: memref<8x32xf32, #tpu.memory_space<vmem>>, %arg1: memref<32x256xbf16, #tpu.memory_space<vmem>>, %arg2: memref<2x256xf32, #tpu.memory_space<vmem>>, %arg3: memref<256x128xbf16, #tpu.memory_space<vmem>>, %arg4: memref<2x128xf32, #tpu.memory_space<vmem>>, %arg5: memref<128x128xbf16, #tpu.memory_space<vmem>>, %arg6: memref<2x128xf32, #tpu.memory_space<vmem>>, %arg7: memref<128x128xbf16, #tpu.memory_space<vmem>>, %arg8: memref<2x128xf32, #tpu.memory_space<vmem>>, %arg9: memref<128x128xbf16, #tpu.memory_space<vmem>>, %arg10: memref<8x128xf32, #tpu.memory_space<vmem>>) attributes {dimension_semantics = [], scalar_prefetch = 0 : i64, scratch_operands = 0 : i64, tpu.core_type = #tpu.core_type<tc>} {
    %c0 = arith.constant 0 : index
    %c0_0 = arith.constant 0 : index
    %0 = vector.load %arg0[%c0, %c0_0] : memref<8x32xf32, #tpu.memory_space<vmem>>, vector<8x32xf32>
    %1 = arith.truncf %0 : vector<8x32xf32> to vector<8x32xbf16>
    %c0_1 = arith.constant 0 : index
    %c0_2 = arith.constant 0 : index
    %2 = vector.load %arg1[%c0_1, %c0_2] : memref<32x256xbf16, #tpu.memory_space<vmem>>, vector<32x256xbf16>
    %c0_3 = arith.constant 0 : index
    %c0_4 = arith.constant 0 : index
    %3 = vector.load %arg2[%c0_3, %c0_4] : memref<2x256xf32, #tpu.memory_space<vmem>>, vector<2x256xf32>
    %cst = arith.constant dense<0.000000e+00> : vector<8x256xf32>
    %4 = tpu.matmul %1, %2, %cst {dimension_numbers = #tpu.dot_dimension_numbers<[1], [0], [0], [1], [0, 0, 1, 1], [], []>} : vector<8x32xbf16>, vector<32x256xbf16>, vector<8x256xf32> -> vector<8x256xf32>
    %cst_5 = arith.constant dense<0.000000e+00> : vector<256xf32>
    %5 = vector.multi_reduction <add>, %4, %cst_5 [0] : vector<8x256xf32> to vector<256xf32>
    %6 = vector.shape_cast %5 : vector<256xf32> to vector<1x256xf32>
    %cst_6 = arith.constant 8.000000e+00 : f32
    %7 = vector.broadcast %cst_6 : f32 to vector<1x256xf32>
    %8 = arith.divf %6, %7 : vector<1x256xf32>
    %9 = arith.mulf %4, %4 : vector<8x256xf32>
    %cst_7 = arith.constant dense<0.000000e+00> : vector<256xf32>
    %10 = vector.multi_reduction <add>, %9, %cst_7 [0] : vector<8x256xf32> to vector<256xf32>
    %11 = vector.shape_cast %10 : vector<256xf32> to vector<1x256xf32>
    %cst_8 = arith.constant 8.000000e+00 : f32
    %12 = vector.broadcast %cst_8 : f32 to vector<1x256xf32>
    %13 = arith.divf %11, %12 : vector<1x256xf32>
    %14 = arith.mulf %8, %8 : vector<1x256xf32>
    %15 = arith.subf %13, %14 : vector<1x256xf32>
    %cst_9 = arith.constant 0.000000e+00 : f32
    %16 = vector.broadcast %cst_9 : f32 to vector<1x256xf32>
    %17 = arith.maximumf %15, %16 : vector<1x256xf32>
    %cst_10 = arith.constant 9.99999974E-6 : f32
    %18 = vector.broadcast %cst_10 : f32 to vector<1x256xf32>
    %19 = arith.addf %17, %18 : vector<1x256xf32>
    %20 = math.rsqrt %19 : vector<1x256xf32>
    %21 = vector.extract_strided_slice %3 {offsets = [0, 0], sizes = [1, 256], strides = [1, 1]} : vector<2x256xf32> to vector<1x256xf32>
    %22 = vector.extract_strided_slice %3 {offsets = [1, 0], sizes = [1, 256], strides = [1, 1]} : vector<2x256xf32> to vector<1x256xf32>
    %23 = vector.broadcast %8 : vector<1x256xf32> to vector<8x256xf32>
    %24 = arith.subf %4, %23 : vector<8x256xf32>
    %25 = arith.truncf %24 : vector<8x256xf32> to vector<8x256xbf16>
    %26 = arith.mulf %21, %20 : vector<1x256xf32>
    %27 = arith.truncf %26 : vector<1x256xf32> to vector<1x256xbf16>
    %28 = arith.truncf %22 : vector<1x256xf32> to vector<1x256xbf16>
    %29 = vector.broadcast %27 : vector<1x256xbf16> to vector<8x256xbf16>
    %30 = arith.mulf %25, %29 : vector<8x256xbf16>
    %31 = vector.broadcast %28 : vector<1x256xbf16> to vector<8x256xbf16>
    %32 = arith.addf %30, %31 : vector<8x256xbf16>
    %cst_11 = arith.constant 0.000000e+00 : bf16
    %33 = vector.broadcast %cst_11 : bf16 to vector<8x256xbf16>
    %34 = arith.maximumf %32, %33 : vector<8x256xbf16>
    %c0_12 = arith.constant 0 : index
    %c0_13 = arith.constant 0 : index
    %35 = vector.load %arg3[%c0_12, %c0_13] : memref<256x128xbf16, #tpu.memory_space<vmem>>, vector<256x128xbf16>
    %c0_14 = arith.constant 0 : index
    %c0_15 = arith.constant 0 : index
    %36 = vector.load %arg4[%c0_14, %c0_15] : memref<2x128xf32, #tpu.memory_space<vmem>>, vector<2x128xf32>
    %cst_16 = arith.constant dense<0.000000e+00> : vector<8x128xf32>
    %37 = tpu.matmul %34, %35, %cst_16 {dimension_numbers = #tpu.dot_dimension_numbers<[1], [0], [0], [1], [0, 0, 1, 1], [], []>} : vector<8x256xbf16>, vector<256x128xbf16>, vector<8x128xf32> -> vector<8x128xf32>
    %cst_17 = arith.constant dense<0.000000e+00> : vector<128xf32>
    %38 = vector.multi_reduction <add>, %37, %cst_17 [0] : vector<8x128xf32> to vector<128xf32>
    %39 = vector.shape_cast %38 : vector<128xf32> to vector<1x128xf32>
    %cst_18 = arith.constant 8.000000e+00 : f32
    %40 = vector.broadcast %cst_18 : f32 to vector<1x128xf32>
    %41 = arith.divf %39, %40 : vector<1x128xf32>
    %42 = arith.mulf %37, %37 : vector<8x128xf32>
    %cst_19 = arith.constant dense<0.000000e+00> : vector<128xf32>
    %43 = vector.multi_reduction <add>, %42, %cst_19 [0] : vector<8x128xf32> to vector<128xf32>
    %44 = vector.shape_cast %43 : vector<128xf32> to vector<1x128xf32>
    %cst_20 = arith.constant 8.000000e+00 : f32
    %45 = vector.broadcast %cst_20 : f32 to vector<1x128xf32>
    %46 = arith.divf %44, %45 : vector<1x128xf32>
    %47 = arith.mulf %41, %41 : vector<1x128xf32>
    %48 = arith.subf %46, %47 : vector<1x128xf32>
    %cst_21 = arith.constant 0.000000e+00 : f32
    %49 = vector.broadcast %cst_21 : f32 to vector<1x128xf32>
    %50 = arith.maximumf %48, %49 : vector<1x128xf32>
    %cst_22 = arith.constant 9.99999974E-6 : f32
    %51 = vector.broadcast %cst_22 : f32 to vector<1x128xf32>
    %52 = arith.addf %50, %51 : vector<1x128xf32>
    %53 = math.rsqrt %52 : vector<1x128xf32>
    %54 = vector.extract_strided_slice %36 {offsets = [0, 0], sizes = [1, 128], strides = [1, 1]} : vector<2x128xf32> to vector<1x128xf32>
    %55 = vector.extract_strided_slice %36 {offsets = [1, 0], sizes = [1, 128], strides = [1, 1]} : vector<2x128xf32> to vector<1x128xf32>
    %56 = vector.broadcast %41 : vector<1x128xf32> to vector<8x128xf32>
    %57 = arith.subf %37, %56 : vector<8x128xf32>
    %58 = arith.truncf %57 : vector<8x128xf32> to vector<8x128xbf16>
    %59 = arith.mulf %54, %53 : vector<1x128xf32>
    %60 = arith.truncf %59 : vector<1x128xf32> to vector<1x128xbf16>
    %61 = arith.truncf %55 : vector<1x128xf32> to vector<1x128xbf16>
    %62 = vector.broadcast %60 : vector<1x128xbf16> to vector<8x128xbf16>
    %63 = arith.mulf %58, %62 : vector<8x128xbf16>
    %64 = vector.broadcast %61 : vector<1x128xbf16> to vector<8x128xbf16>
    %65 = arith.addf %63, %64 : vector<8x128xbf16>
    %cst_23 = arith.constant 0.000000e+00 : bf16
    %66 = vector.broadcast %cst_23 : bf16 to vector<8x128xbf16>
    %67 = arith.maximumf %65, %66 : vector<8x128xbf16>
    %c0_24 = arith.constant 0 : index
    %c0_25 = arith.constant 0 : index
    %68 = vector.load %arg5[%c0_24, %c0_25] : memref<128x128xbf16, #tpu.memory_space<vmem>>, vector<128x128xbf16>
    %c0_26 = arith.constant 0 : index
    %c0_27 = arith.constant 0 : index
    %69 = vector.load %arg6[%c0_26, %c0_27] : memref<2x128xf32, #tpu.memory_space<vmem>>, vector<2x128xf32>
    %cst_28 = arith.constant dense<0.000000e+00> : vector<8x128xf32>
    %70 = tpu.matmul %67, %68, %cst_28 {dimension_numbers = #tpu.dot_dimension_numbers<[1], [0], [0], [1], [0, 0, 1, 1], [], []>} : vector<8x128xbf16>, vector<128x128xbf16>, vector<8x128xf32> -> vector<8x128xf32>
    %cst_29 = arith.constant dense<0.000000e+00> : vector<128xf32>
    %71 = vector.multi_reduction <add>, %70, %cst_29 [0] : vector<8x128xf32> to vector<128xf32>
    %72 = vector.shape_cast %71 : vector<128xf32> to vector<1x128xf32>
    %cst_30 = arith.constant 8.000000e+00 : f32
    %73 = vector.broadcast %cst_30 : f32 to vector<1x128xf32>
    %74 = arith.divf %72, %73 : vector<1x128xf32>
    %75 = arith.mulf %70, %70 : vector<8x128xf32>
    %cst_31 = arith.constant dense<0.000000e+00> : vector<128xf32>
    %76 = vector.multi_reduction <add>, %75, %cst_31 [0] : vector<8x128xf32> to vector<128xf32>
    %77 = vector.shape_cast %76 : vector<128xf32> to vector<1x128xf32>
    %cst_32 = arith.constant 8.000000e+00 : f32
    %78 = vector.broadcast %cst_32 : f32 to vector<1x128xf32>
    %79 = arith.divf %77, %78 : vector<1x128xf32>
    %80 = arith.mulf %74, %74 : vector<1x128xf32>
    %81 = arith.subf %79, %80 : vector<1x128xf32>
    %cst_33 = arith.constant 0.000000e+00 : f32
    %82 = vector.broadcast %cst_33 : f32 to vector<1x128xf32>
    %83 = arith.maximumf %81, %82 : vector<1x128xf32>
    %cst_34 = arith.constant 9.99999974E-6 : f32
    %84 = vector.broadcast %cst_34 : f32 to vector<1x128xf32>
    %85 = arith.addf %83, %84 : vector<1x128xf32>
    %86 = math.rsqrt %85 : vector<1x128xf32>
    %87 = vector.extract_strided_slice %69 {offsets = [0, 0], sizes = [1, 128], strides = [1, 1]} : vector<2x128xf32> to vector<1x128xf32>
    %88 = vector.extract_strided_slice %69 {offsets = [1, 0], sizes = [1, 128], strides = [1, 1]} : vector<2x128xf32> to vector<1x128xf32>
    %89 = vector.broadcast %74 : vector<1x128xf32> to vector<8x128xf32>
    %90 = arith.subf %70, %89 : vector<8x128xf32>
    %91 = arith.truncf %90 : vector<8x128xf32> to vector<8x128xbf16>
    %92 = arith.mulf %87, %86 : vector<1x128xf32>
    %93 = arith.truncf %92 : vector<1x128xf32> to vector<1x128xbf16>
    %94 = arith.truncf %88 : vector<1x128xf32> to vector<1x128xbf16>
    %95 = vector.broadcast %93 : vector<1x128xbf16> to vector<8x128xbf16>
    %96 = arith.mulf %91, %95 : vector<8x128xbf16>
    %97 = vector.broadcast %94 : vector<1x128xbf16> to vector<8x128xbf16>
    %98 = arith.addf %96, %97 : vector<8x128xbf16>
    %cst_35 = arith.constant 0.000000e+00 : bf16
    %99 = vector.broadcast %cst_35 : bf16 to vector<8x128xbf16>
    %100 = arith.maximumf %98, %99 : vector<8x128xbf16>
    %c0_36 = arith.constant 0 : index
    %c0_37 = arith.constant 0 : index
    %101 = vector.load %arg7[%c0_36, %c0_37] : memref<128x128xbf16, #tpu.memory_space<vmem>>, vector<128x128xbf16>
    %c0_38 = arith.constant 0 : index
    %c0_39 = arith.constant 0 : index
    %102 = vector.load %arg8[%c0_38, %c0_39] : memref<2x128xf32, #tpu.memory_space<vmem>>, vector<2x128xf32>
    %cst_40 = arith.constant dense<0.000000e+00> : vector<8x128xf32>
    %103 = tpu.matmul %100, %101, %cst_40 {dimension_numbers = #tpu.dot_dimension_numbers<[1], [0], [0], [1], [0, 0, 1, 1], [], []>} : vector<8x128xbf16>, vector<128x128xbf16>, vector<8x128xf32> -> vector<8x128xf32>
    %cst_41 = arith.constant dense<0.000000e+00> : vector<128xf32>
    %104 = vector.multi_reduction <add>, %103, %cst_41 [0] : vector<8x128xf32> to vector<128xf32>
    %105 = vector.shape_cast %104 : vector<128xf32> to vector<1x128xf32>
    %cst_42 = arith.constant 8.000000e+00 : f32
    %106 = vector.broadcast %cst_42 : f32 to vector<1x128xf32>
    %107 = arith.divf %105, %106 : vector<1x128xf32>
    %108 = arith.mulf %103, %103 : vector<8x128xf32>
    %cst_43 = arith.constant dense<0.000000e+00> : vector<128xf32>
    %109 = vector.multi_reduction <add>, %108, %cst_43 [0] : vector<8x128xf32> to vector<128xf32>
    %110 = vector.shape_cast %109 : vector<128xf32> to vector<1x128xf32>
    %cst_44 = arith.constant 8.000000e+00 : f32
    %111 = vector.broadcast %cst_44 : f32 to vector<1x128xf32>
    %112 = arith.divf %110, %111 : vector<1x128xf32>
    %113 = arith.mulf %107, %107 : vector<1x128xf32>
    %114 = arith.subf %112, %113 : vector<1x128xf32>
    %cst_45 = arith.constant 0.000000e+00 : f32
    %115 = vector.broadcast %cst_45 : f32 to vector<1x128xf32>
    %116 = arith.maximumf %114, %115 : vector<1x128xf32>
    %cst_46 = arith.constant 9.99999974E-6 : f32
    %117 = vector.broadcast %cst_46 : f32 to vector<1x128xf32>
    %118 = arith.addf %116, %117 : vector<1x128xf32>
    %119 = math.rsqrt %118 : vector<1x128xf32>
    %120 = vector.extract_strided_slice %102 {offsets = [0, 0], sizes = [1, 128], strides = [1, 1]} : vector<2x128xf32> to vector<1x128xf32>
    %121 = vector.extract_strided_slice %102 {offsets = [1, 0], sizes = [1, 128], strides = [1, 1]} : vector<2x128xf32> to vector<1x128xf32>
    %122 = vector.broadcast %107 : vector<1x128xf32> to vector<8x128xf32>
    %123 = arith.subf %103, %122 : vector<8x128xf32>
    %124 = arith.truncf %123 : vector<8x128xf32> to vector<8x128xbf16>
    %125 = arith.mulf %120, %119 : vector<1x128xf32>
    %126 = arith.truncf %125 : vector<1x128xf32> to vector<1x128xbf16>
    %127 = arith.truncf %121 : vector<1x128xf32> to vector<1x128xbf16>
    %128 = vector.broadcast %126 : vector<1x128xbf16> to vector<8x128xbf16>
    %129 = arith.mulf %124, %128 : vector<8x128xbf16>
    %130 = vector.broadcast %127 : vector<1x128xbf16> to vector<8x128xbf16>
    %131 = arith.addf %129, %130 : vector<8x128xbf16>
    %cst_47 = arith.constant 0.000000e+00 : bf16
    %132 = vector.broadcast %cst_47 : bf16 to vector<8x128xbf16>
    %133 = arith.maximumf %131, %132 : vector<8x128xbf16>
    %c0_48 = arith.constant 0 : index
    %c0_49 = arith.constant 0 : index
    %134 = vector.load %arg9[%c0_48, %c0_49] : memref<128x128xbf16, #tpu.memory_space<vmem>>, vector<128x128xbf16>
    %cst_50 = arith.constant dense<0.000000e+00> : vector<8x128xf32>
    %135 = tpu.matmul %133, %134, %cst_50 {dimension_numbers = #tpu.dot_dimension_numbers<[1], [0], [0], [1], [0, 0, 1, 1], [], []>} : vector<8x128xbf16>, vector<128x128xbf16>, vector<8x128xf32> -> vector<8x128xf32>
    %c0_51 = arith.constant 0 : index
    %c0_52 = arith.constant 0 : index
    %136 = vector.load %arg10[%c0_51, %c0_52] : memref<8x128xf32, #tpu.memory_space<vmem>>, vector<8x128xf32>
    tpu.vector_store %arg10[%c0_51, %c0_52], %135 {strides = array<i32>} : memref<8x128xf32, #tpu.memory_space<vmem>>, vector<8x128xf32>,
    return
  }
}

</mosaic_0001>

<llo_original>
// kernel: mlp_forward.1
$region0: #{mlp_forward.1}
  #allocation0 [shape = 'u32[]', space=smem, size = 0x4, offset = 0x4, fixed_abs, tag = 'smem constant byte address 0x4 - core index']
  #allocation1 [shape = 'u32[144,128]{1,0:T(1,128)}', space=vmem, size = 0x12000, scoped, tag = 'internal scratch']
  %s0 = inlined_call_operand.hbm [shape: f32[8,32], index: 0, kind: input, shape index: {}]
  %s1 = inlined_call_operand.hbm [shape: bf16[32,256], index: 1, kind: input, shape index: {}]
  %s2 = inlined_call_operand.vmem [shape: f32[2,256], index: 2, kind: input, shape index: {}]
  %s3 = inlined_call_operand.hbm [shape: bf16[256,128], index: 3, kind: input, shape index: {}]
  %s4 = inlined_call_operand.vmem [shape: f32[2,128], index: 4, kind: input, shape index: {}]
  %s5 = inlined_call_operand.hbm [shape: bf16[128,128], index: 5, kind: input, shape index: {}]
  %s6 = inlined_call_operand.vmem [shape: f32[2,128], index: 6, kind: input, shape index: {}]
  %s7 = inlined_call_operand.hbm [shape: bf16[128,128], index: 7, kind: input, shape index: {}]
  %s8 = inlined_call_operand.vmem [shape: f32[2,128], index: 8, kind: input, shape index: {}]
  %s9 = inlined_call_operand.hbm [shape: bf16[128,128], index: 9, kind: input, shape index: {}]
  %s10 = inlined_call_operand.hbm [shape: f32[8,128], index: 10, kind: output, shape index: {}]
  %s11 = sld [smem:[#allocation0]]
  $region74: #{mlp_forward.1} parent=0
    _
  %s13 = ssub.s32 1, %s11
  %s14 = scalar_select 0, %s13, %s11
  $region1: #{mlp_forward.1} parent=0
    #allocation2 [shape = 'u8[4096]{0}', space=vmem, size = 0x1000, scoped, tag = 'input window, operand 0, single buffered']
    #allocation3 [shape = 's32[1]{0}', space=sflag, size = 0x4, scoped, tag = 'scoped memory for mlp_forward.1']
    #allocation4 [shape = 's32[1]{0}', space=sflag, size = 0x4, scoped, tag = 'scoped memory for mlp_forward.1']
    #allocation5 [shape = 'u8[16384]{0}', space=vmem, size = 0x4000, scoped, tag = 'input window, operand 1, single buffered']
    #allocation6 [shape = 's32[1]{0}', space=sflag, size = 0x4, scoped, tag = 'scoped memory for mlp_forward.1']
    #allocation7 [shape = 'u8[65536]{0}', space=vmem, size = 0x10000, scoped, tag = 'input window, operand 3, single buffered']
    #allocation8 [shape = 'u8[32768]{0}', space=vmem, size = 0x8000, scoped, tag = 'input window, operand 5, single buffered']
    #allocation9 [shape = 's32[1]{0}', space=sflag, size = 0x4, scoped, tag = 'scoped memory for mlp_forward.1']
    #allocation10 [shape = 'u8[32768]{0}', space=vmem, size = 0x8000, scoped, tag = 'input window, operand 7, single buffered']
    #allocation11 [shape = 'u8[32768]{0}', space=vmem, size = 0x8000, scoped, tag = 'input window, operand 9, single buffered']
    #allocation12 [shape = 's32[1]{0}', space=sflag, size = 0x4, scoped, tag = 'scoped memory for mlp_forward.1']
    #allocation13 [shape = 'u8[4096]{0}', space=vmem, size = 0x1000, scoped, tag = 'output window, operand 0, single buffered']
    %15 = vsyncpa [#allocation3], 0
    %16 = vsyncpa [#allocation6], 0
    %17 = vsyncpa [#allocation9], 0
    %18 = vsyncpa [#allocation12], 0
    %19 = vsyncpa [#allocation4], 0
    // Predicated region
    $region2: #{mlp_forward.1} parent=1 // pred_check
      _
    $region3: #{mlp_forward.1} parent=1 // pred_check_branch
      %21 = sbr.rel (0) target = $region5
    $region4: #{mlp_forward.1} parent=1 // pred_region
      %s23 = ssub.s32 128, 128
      %24 = vsyncadd [#allocation3], %s23
      %s26 = sshll.u32 [#allocation2], 4
      %s27 = int_to_ptr.vmem [resolvable:$true] %s26
      %29 = dma.hbm_to_vmem [thread:$0]  %s0, 128, %s27, [#allocation3]
    $region5: #{mlp_forward.1} parent=1 // pred_fallthru
      _
    // Predicated region
    $region6: #{mlp_forward.1} parent=1 // pred_check
      _
    $region7: #{mlp_forward.1} parent=1 // pred_check_branch
      %31 = sbr.rel (0) target = $region9
    $region8: #{mlp_forward.1} parent=1 // pred_region
      %s33 = ssub.s32 512, 512
      %34 = vsyncadd [#allocation6], %s33
      %s35 = sshll.u32 [#allocation5], 4
      %s36 = int_to_ptr.vmem [resolvable:$true] %s35
      %41 = dma.hbm_to_vmem [thread:$0]  %s1, 512, %s36, [#allocation6], 128, 128, 8
    $region9: #{mlp_forward.1} parent=1 // pred_fallthru
      _
    // Predicated region
    $region10: #{mlp_forward.1} parent=1 // pred_check
      _
    $region11: #{mlp_forward.1} parent=1 // pred_check_branch
      %43 = sbr.rel (0) target = $region13
    $region12: #{mlp_forward.1} parent=1 // pred_region
      _
    $region13: #{mlp_forward.1} parent=1 // pred_fallthru
      _
    // Predicated region
    $region14: #{mlp_forward.1} parent=1 // pred_check
      _
    $region15: #{mlp_forward.1} parent=1 // pred_check_branch
      %45 = sbr.rel (0) target = $region17
    $region16: #{mlp_forward.1} parent=1 // pred_region
      %s47 = ssub.s32 2048, 2048
      %48 = vsyncadd [#allocation6], %s47
      %s49 = sshll.u32 [#allocation7], 4
      %s50 = int_to_ptr.vmem [resolvable:$true] %s49
      %55 = dma.hbm_to_vmem [thread:$0]  %s3, 2048, %s50, [#allocation6], 64, 64, 4
    $region17: #{mlp_forward.1} parent=1 // pred_fallthru
      _
    // Predicated region
    $region18: #{mlp_forward.1} parent=1 // pred_check
      _
    $region19: #{mlp_forward.1} parent=1 // pred_check_branch
      %57 = sbr.rel (0) target = $region21
    $region20: #{mlp_forward.1} parent=1 // pred_region
      _
    $region21: #{mlp_forward.1} parent=1 // pred_fallthru
      _
    // Predicated region
    $region22: #{mlp_forward.1} parent=1 // pred_check
      _
    $region23: #{mlp_forward.1} parent=1 // pred_check_branch
      %59 = sbr.rel (0) target = $region25
    $region24: #{mlp_forward.1} parent=1 // pred_region
      %s61 = ssub.s32 1024, 1024
      %62 = vsyncadd [#allocation9], %s61
      %s63 = sshll.u32 [#allocation8], 4
      %s64 = int_to_ptr.vmem [resolvable:$true] %s63
      %69 = dma.hbm_to_vmem [thread:$0]  %s5, 1024, %s64, [#allocation9], 64, 64, 4
    $region25: #{mlp_forward.1} parent=1 // pred_fallthru
      _
    // Predicated region
    $region26: #{mlp_forward.1} parent=1 // pred_check
      _
    $region27: #{mlp_forward.1} parent=1 // pred_check_branch
      %71 = sbr.rel (0) target = $region29
    $region28: #{mlp_forward.1} parent=1 // pred_region
      _
    $region29: #{mlp_forward.1} parent=1 // pred_fallthru
      _
    // Predicated region
    $region30: #{mlp_forward.1} parent=1 // pred_check
      _
    $region31: #{mlp_forward.1} parent=1 // pred_check_branch
      %73 = sbr.rel (0) target = $region33
    $region32: #{mlp_forward.1} parent=1 // pred_region
      %s75 = ssub.s32 1024, 1024
      %76 = vsyncadd [#allocation9], %s75
      %s77 = sshll.u32 [#allocation10], 4
      %s78 = int_to_ptr.vmem [resolvable:$true] %s77
      %83 = dma.hbm_to_vmem [thread:$0]  %s7, 1024, %s78, [#allocation9], 64, 64, 4
    $region33: #{mlp_forward.1} parent=1 // pred_fallthru
      _
    // Predicated region
    $region34: #{mlp_forward.1} parent=1 // pred_check
      _
    $region35: #{mlp_forward.1} parent=1 // pred_check_branch
      %85 = sbr.rel (0) target = $region37
    $region36: #{mlp_forward.1} parent=1 // pred_region
      _
    $region37: #{mlp_forward.1} parent=1 // pred_fallthru
      _
    // Predicated region
    $region38: #{mlp_forward.1} parent=1 // pred_check
      _
    $region39: #{mlp_forward.1} parent=1 // pred_check_branch
      %87 = sbr.rel (0) target = $region41
    $region40: #{mlp_forward.1} parent=1 // pred_region
      %s89 = ssub.s32 1024, 1024
      %90 = vsyncadd [#allocation12], %s89
      %s91 = sshll.u32 [#allocation11], 4
      %s92 = int_to_ptr.vmem [resolvable:$true] %s91
      %97 = dma.hbm_to_vmem [thread:$0]  %s9, 1024, %s92, [#allocation12], 64, 64, 4
    $region41: #{mlp_forward.1} parent=1 // pred_fallthru
      _
    // Predicated region
    $region42: #{mlp_forward.1} parent=1 // pred_check
      _
    $region43: #{mlp_forward.1} parent=1 // pred_check_branch
      %99 = sbr.rel (0) target = $region45
    $region44: #{mlp_forward.1} parent=1 // pred_region
      %100 = dma.done [#allocation3], 128
    $region45: #{mlp_forward.1} parent=1 // pred_fallthru
      _
    // Predicated region
    $region46: #{mlp_forward.1} parent=1 // pred_check
      _
    $region47: #{mlp_forward.1} parent=1 // pred_check_branch
      %102 = sbr.rel (0) target = $region49
    $region48: #{mlp_forward.1} parent=1 // pred_region
      %103 = dma.done [#allocation6], 512
    $region49: #{mlp_forward.1} parent=1 // pred_fallthru
      _
    // Predicated region
    $region50: #{mlp_forward.1} parent=1 // pred_check
      _
    $region51: #{mlp_forward.1} parent=1 // pred_check_branch
      %105 = sbr.rel (0) target = $region53
    $region52: #{mlp_forward.1} parent=1 // pred_region
      %106 = dma.done [#allocation6], 2048
    $region53: #{mlp_forward.1} parent=1 // pred_fallthru
      _
    // Predicated region
    $region54: #{mlp_forward.1} parent=1 // pred_check
      _
    $region55: #{mlp_forward.1} parent=1 // pred_check_branch
      %108 = sbr.rel (0) target = $region57
    $region56: #{mlp_forward.1} parent=1 // pred_region
      %109 = dma.done [#allocation9], 1024
    $region57: #{mlp_forward.1} parent=1 // pred_fallthru
      _
    // Predicated region
    $region58: #{mlp_forward.1} parent=1 // pred_check
      _
    $region59: #{mlp_forward.1} parent=1 // pred_check_branch
      %111 = sbr.rel (0) target = $region61
    $region60: #{mlp_forward.1} parent=1 // pred_region
      %112 = dma.done [#allocation9], 1024
    $region61: #{mlp_forward.1} parent=1 // pred_fallthru
      _
    // Predicated region
    $region62: #{mlp_forward.1} parent=1 // pred_check
      _
    $region63: #{mlp_forward.1} parent=1 // pred_check_branch
      %114 = sbr.rel (0) target = $region65
    $region64: #{mlp_forward.1} parent=1 // pred_region
      %115 = dma.done [#allocation12], 1024
    $region65: #{mlp_forward.1} parent=1 // pred_fallthru
      _
    %v117 = vld [vmem:[#allocation2] sm:$0xff]
    %v118 = vpack.c.bf16 %v117, %v117
    %v119 = vld [vmem:[#allocation5] sm:$0xff]
    %v120 = vld [vmem:[#allocation5 + $0x8] sm:$0xff]
    %v121 = vld [vmem:[#allocation5 + $0x10] sm:$0xff]
    %v122 = vld [vmem:[#allocation5 + $0x18] sm:$0xff]
    %v123 = vld [vmem:[%s2] sm:$0xf]
    %v128 = vunpack.c.l.b16 %v119
    %v129 = vunpack.c.h.b16 %v119
    %v130 = vunpack.c.l.b16 %v120
    %v131 = vunpack.c.h.b16 %v120
    %v132 = vunpack.c.l.b16 %v121
    %v133 = vunpack.c.h.b16 %v121
    %v134 = vunpack.c.l.b16 %v122
    %v135 = vunpack.c.h.b16 %v122
    %v136 = vpack.c.b16 %v130, %v128
    %v137 = vpack.c.b16 %v131, %v129
    %v138 = vpack.c.b16 %v134, %v132
    %v139 = vpack.c.b16 %v135, %v133
    %vm144 = vcmask 261120
    %v146 = vsel %vm144, %v118, 0
    %148 = vmatprep.subr.bf16.mxu0 %v137
    %149 = vmatpush1.bf16.msra.mxu0 %v136
    %150 = vmatprep.subr.bf16.mxu0 %v139
    %151 = vmatpush1.bf16.msra.mxu0 %v138
    %152 = vmatprep.subr.bf16.mxu0 0
    %153 = vmatpush1.bf16.msra.mxu0 0
    %154 = vmatprep.subr.bf16.mxu0 0
    %155 = vmatpush1.bf16.msra.mxu0 0
    %156 = vmatprep.subr.bf16.mxu0 0
    %157 = vmatpush1.bf16.msra.mxu0 0
    %158 = vmatprep.subr.bf16.mxu0 0
    %159 = vmatpush1.bf16.msra.mxu0 0
    %160 = vmatprep.subr.bf16.mxu0 0
    %161 = vmatpush1.bf16.msra.mxu0 0
    %162 = vmatprep.subr.bf16.mxu0 0
    %163 = vmatpush1.bf16.msra.mxu0 0
    %164 = vmatprep.subr.bf16.mxu0 0
    %165 = vmatpush1.bf16.msra.mxu0 0
    %166 = vmatprep.subr.bf16.mxu0 0
    %167 = vmatpush1.bf16.msra.mxu0 0
    %168 = vmatprep.subr.bf16.mxu0 0
    %169 = vmatpush1.bf16.msra.mxu0 0
    %170 = vmatprep.subr.bf16.mxu0 0
    %171 = vmatpush1.bf16.msra.mxu0 0
    %172 = vmatprep.subr.bf16.mxu0 0
    %173 = vmatpush1.bf16.msra.mxu0 0
    %174 = vmatprep.subr.bf16.mxu0 0
    %175 = vmatpush1.bf16.msra.mxu0 0
    %176 = vmatprep.subr.bf16.mxu0 0
    %177 = vmatpush1.bf16.msra.mxu0 0
    %178 = vmatprep.subr.bf16.mxu0 0
    %179 = vmatpush1.bf16.msra.mxu0 0
    %180 = vmatprep.mubr.bf16.mxu0 0
    %181 = vmatmul.mubr.bf16.gmra.mrb[0].mxu0 %v146
    %v182 = vpop.f32.mrb[0].mxu0
    %v183 = vadd.f32 0.0, %v182
    %v184 = vpop.f32.mrb[0].mxu0
    %v185 = vadd.f32 0.0, %v184
    %v186 = vpop.f32.mrb[0].mxu0
    %v187 = vpop.f32.mrb[0].mxu0
    %188 = vdwg.mxu0
    %v189 = vrot.slane %v183, 4
    %v190 = vadd.f32 %v183, %v189
    %v191 = vrot.slane %v190, 2
    %v192 = vadd.f32 %v190, %v191
    %v193 = vrot.slane %v192, 1
    %v194 = vadd.f32 %v192, %v193
    %v195 = vrot.slane %v185, 4
    %v196 = vadd.f32 %v185, %v195
    %v197 = vrot.slane %v196, 2
    %v198 = vadd.f32 %v196, %v197
    %v199 = vrot.slane %v198, 1
    %v200 = vadd.f32 %v198, %v199
    %v201 = vrcp.pop 8.0
    %v202 = vmul.f32 %v194, %v201
    %v203 = vmul.f32 %v200, %v201
    %v204 = vmul.f32 %v183, %v183
    %v205 = vmul.f32 %v185, %v185
    %v206 = vrot.slane %v204, 4
    %v207 = vadd.f32 %v204, %v206
    %v208 = vrot.slane %v207, 2
    %v209 = vadd.f32 %v207, %v208
    %v210 = vrot.slane %v209, 1
    %v211 = vadd.f32 %v209, %v210
    %v212 = vrot.slane %v205, 4
    %v213 = vadd.f32 %v205, %v212
    %v214 = vrot.slane %v213, 2
    %v215 = vadd.f32 %v213, %v214
    %v216 = vrot.slane %v215, 1
    %v217 = vadd.f32 %v215, %v216
    %v218 = vmul.f32 %v211, %v201
    %v219 = vmul.f32 %v217, %v201
    %v220 = vmul.f32 %v202, %v202
    %v221 = vmul.f32 %v203, %v203
    %v222 = vsub.f32 %v218, %v220
    %v223 = vsub.f32 %v219, %v221
    %v224 = vmax.f32 %v222, 0.0
    %v225 = vmax.f32 %v223, 0.0
    %v226 = vadd.f32 %v224, 1e-05
    %v227 = vadd.f32 %v225, 1e-05
    %v228 = vrsqrt.pop %v226
    %v229 = vrsqrt.pop %v227
    %v230 = vsub.f32 %v183, %v202
    %v231 = vsub.f32 %v185, %v203
    %v232 = vpack.c.bf16 %v230, %v230
    %v233 = vpack.c.bf16 %v231, %v231
    %v236 = vcombine.low %v228, %v229
    %v238 = vunpack.c.l.s4 1983009808
    %v239 = vunpack.c.0.s8 %v238
    %v240 = vlaneseq
    %v241 = vshrl.u32 %v240, 7
    %v242 = vsub.s32 %v239, %v241
    %v243 = vrot.slane %v236, %v242
    %v245 = vmul.f32 %v123, %v243
    %v247 = vlaneseq
    %v248 = vshrl.u32 %v247, 7
    %v249 = vsub.s32 0, %v248
    %v250 = vrot.slane %v245, %v249
    %v251 = vlaneseq
    %v252 = vshrl.u32 %v251, 7
    %v253 = vsub.s32 2, %v252
    %v254 = vrot.slane %v245, %v253
    %v257 = vpack.c.bf16 %v250, %v250
    %v258 = vpack.c.bf16 %v254, %v254
    %v260 = vlaneseq
    %v261 = vshrl.u32 %v260, 7
    %v262 = vsub.s32 1, %v261
    %v263 = vrot.slane %v123, %v262
    %v264 = vlaneseq
    %v265 = vshrl.u32 %v264, 7
    %v266 = vsub.s32 3, %v265
    %v267 = vrot.slane %v123, %v266
    %v270 = vpack.c.bf16 %v263, %v263
    %v271 = vpack.c.bf16 %v267, %v267
    %v273 = vpack.i.b16 %v257, %v257
    %v275 = vlaneseq
    %v276 = vshrl.u32 %v275, 7
    %v277 = vsub.s32 0, %v276
    %v278 = vrot.slane %v273, %v277
    %v280 = vpack.i.b16 %v258, %v258
    %v282 = vlaneseq
    %v283 = vshrl.u32 %v282, 7
    %v284 = vsub.s32 0, %v283
    %v285 = vrot.slane %v280, %v284
    %v286 = vmul.bf16 %v232, %v278
    %v287 = vmul.bf16 %v233, %v285
    %v289 = vshrl.u32 %v270, 16
    %v290 = vpack.i.b16 %v289, %v289
    %v292 = vlaneseq
    %v293 = vshrl.u32 %v292, 7
    %v294 = vsub.s32 0, %v293
    %v295 = vrot.slane %v290, %v294
    %v297 = vshrl.u32 %v271, 16
    %v298 = vpack.i.b16 %v297, %v297
    %v300 = vlaneseq
    %v301 = vshrl.u32 %v300, 7
    %v302 = vsub.s32 0, %v301
    %v303 = vrot.slane %v298, %v302
    %v304 = vadd.bf16 %v286, %v295
    %v305 = vadd.bf16 %v287, %v303
    %v306 = vmax.bf16 %v304, 0
    %v307 = vmax.bf16 %v305, 0
    %v308 = vld [vmem:[#allocation7] sm:$0xf]
    %v309 = vld [vmem:[#allocation7 + $0x4] sm:$0xf]
    %v310 = vld [vmem:[#allocation7 + $0x8] sm:$0xf]
    %v311 = vld [vmem:[#allocation7 + $0xc] sm:$0xf]
    %v312 = vld [vmem:[#allocation7 + $0x10] sm:$0xf]
    %v313 = vld [vmem:[#allocation7 + $0x14] sm:$0xf]
    %v314 = vld [vmem:[#allocation7 + $0x18] sm:$0xf]
    %v315 = vld [vmem:[#allocation7 + $0x1c] sm:$0xf]
    %v316 = vld [vmem:[#allocation7 + $0x20] sm:$0xf]
    %v317 = vld [vmem:[#allocation7 + $0x24] sm:$0xf]
    %v318 = vld [vmem:[#allocation7 + $0x28] sm:$0xf]
    %v319 = vld [vmem:[#allocation7 + $0x2c] sm:$0xf]
    %v320 = vld [vmem:[#allocation7 + $0x30] sm:$0xf]
    %v321 = vld [vmem:[#allocation7 + $0x34] sm:$0xf]
    %v322 = vld [vmem:[#allocation7 + $0x38] sm:$0xf]
    %v323 = vld [vmem:[#allocation7 + $0x3c] sm:$0xf]
    %v324 = vld [vmem:[#allocation7 + $0x40] sm:$0xf]
    %v325 = vld [vmem:[#allocation7 + $0x44] sm:$0xf]
    %v326 = vld [vmem:[#allocation7 + $0x48] sm:$0xf]
    %v327 = vld [vmem:[#allocation7 + $0x4c] sm:$0xf]
    %v328 = vld [vmem:[#allocation7 + $0x50] sm:$0xf]
    %v329 = vld [vmem:[#allocation7 + $0x54] sm:$0xf]
    %v330 = vld [vmem:[#allocation7 + $0x58] sm:$0xf]
    %v331 = vld [vmem:[#allocation7 + $0x5c] sm:$0xf]
    %v332 = vld [vmem:[#allocation7 + $0x60] sm:$0xf]
    %v333 = vld [vmem:[#allocation7 + $0x64] sm:$0xf]
    %v334 = vld [vmem:[#allocation7 + $0x68] sm:$0xf]
    %v335 = vld [vmem:[#allocation7 + $0x6c] sm:$0xf]
    %v336 = vld [vmem:[#allocation7 + $0x70] sm:$0xf]
    %v337 = vld [vmem:[#allocation7 + $0x74] sm:$0xf]
    %v338 = vld [vmem:[#allocation7 + $0x78] sm:$0xf]
    %v339 = vld [vmem:[#allocation7 + $0x7c] sm:$0xf]
    %v340 = vld [vmem:[%s4] sm:$0x3]
    %v373 = vunpack.c.l.b16 %v308
    %v374 = vunpack.c.l.b16 %v309
    %v375 = vunpack.c.l.b16 %v310
    %v376 = vunpack.c.l.b16 %v311
    %v377 = vunpack.c.l.b16 %v312
    %v378 = vunpack.c.l.b16 %v313
    %v379 = vunpack.c.l.b16 %v314
    %v380 = vunpack.c.l.b16 %v315
    %v381 = vunpack.c.l.b16 %v316
    %v382 = vunpack.c.l.b16 %v317
    %v383 = vunpack.c.l.b16 %v318
    %v384 = vunpack.c.l.b16 %v319
    %v385 = vunpack.c.l.b16 %v320
    %v386 = vunpack.c.l.b16 %v321
    %v387 = vunpack.c.l.b16 %v322
    %v388 = vunpack.c.l.b16 %v323
    %v389 = vunpack.c.l.b16 %v324
    %v390 = vunpack.c.l.b16 %v325
    %v391 = vunpack.c.l.b16 %v326
    %v392 = vunpack.c.l.b16 %v327
    %v393 = vunpack.c.l.b16 %v328
    %v394 = vunpack.c.l.b16 %v329
    %v395 = vunpack.c.l.b16 %v330
    %v396 = vunpack.c.l.b16 %v331
    %v397 = vunpack.c.l.b16 %v332
    %v398 = vunpack.c.l.b16 %v333
    %v399 = vunpack.c.l.b16 %v334
    %v400 = vunpack.c.l.b16 %v335
    %v401 = vunpack.c.l.b16 %v336
    %v402 = vunpack.c.l.b16 %v337
    %v403 = vunpack.c.l.b16 %v338
    %v404 = vunpack.c.l.b16 %v339
    %v405 = vpack.c.b16 %v374, %v373
    %v406 = vpack.c.b16 %v376, %v375
    %v407 = vpack.c.b16 %v378, %v377
    %v408 = vpack.c.b16 %v380, %v379
    %v409 = vpack.c.b16 %v382, %v381
    %v410 = vpack.c.b16 %v384, %v383
    %v411 = vpack.c.b16 %v386, %v385
    %v412 = vpack.c.b16 %v388, %v387
    %v413 = vpack.c.b16 %v390, %v389
    %v414 = vpack.c.b16 %v392, %v391
    %v415 = vpack.c.b16 %v394, %v393
    %v416 = vpack.c.b16 %v396, %v395
    %v417 = vpack.c.b16 %v398, %v397
    %v418 = vpack.c.b16 %v400, %v399
    %v419 = vpack.c.b16 %v402, %v401
    %v420 = vpack.c.b16 %v404, %v403
    %437 = vmatprep.subr.bf16.mxu0 0
    %438 = vmatpush1.bf16.msra.mxu0 %v405
    %439 = vmatprep.subr.bf16.mxu0 0
    %440 = vmatpush1.bf16.msra.mxu0 %v406
    %441 = vmatprep.subr.bf16.mxu0 0
    %442 = vmatpush1.bf16.msra.mxu0 %v407
    %443 = vmatprep.subr.bf16.mxu0 0
    %444 = vmatpush1.bf16.msra.mxu0 %v408
    %445 = vmatprep.subr.bf16.mxu0 0
    %446 = vmatpush1.bf16.msra.mxu0 %v409
    %447 = vmatprep.subr.bf16.mxu0 0
    %448 = vmatpush1.bf16.msra.mxu0 %v410
    %449 = vmatprep.subr.bf16.mxu0 0
    %450 = vmatpush1.bf16.msra.mxu0 %v411
    %451 = vmatprep.subr.bf16.mxu0 0
    %452 = vmatpush1.bf16.msra.mxu0 %v412
    %453 = vmatprep.subr.bf16.mxu0 0
    %454 = vmatpush1.bf16.msra.mxu0 %v413
    %455 = vmatprep.subr.bf16.mxu0 0
    %456 = vmatpush1.bf16.msra.mxu0 %v414
    %457 = vmatprep.subr.bf16.mxu0 0
    %458 = vmatpush1.bf16.msra.mxu0 %v415
    %459 = vmatprep.subr.bf16.mxu0 0
    %460 = vmatpush1.bf16.msra.mxu0 %v416
    %461 = vmatprep.subr.bf16.mxu0 0
    %462 = vmatpush1.bf16.msra.mxu0 %v417
    %463 = vmatprep.subr.bf16.mxu0 0
    %464 = vmatpush1.bf16.msra.mxu0 %v418
    %465 = vmatprep.subr.bf16.mxu0 0
    %466 = vmatpush1.bf16.msra.mxu0 %v419
    %467 = vmatprep.subr.bf16.mxu0 0
    %468 = vmatpush1.bf16.msra.mxu0 %v420
    %469 = vmatprep.mubr.bf16.mxu0 %v307
    %470 = vmatmul.mubr.bf16.gmra.mrb[0].mxu0 %v306
    %v471 = vpop.f32.mrb[0].mxu0
    %v472 = vadd.f32 0.0, %v471
    %v473 = vpop.f32.mrb[0].mxu0
    %v474 = vpop.f32.mrb[0].mxu0
    %v475 = vpop.f32.mrb[0].mxu0
    %476 = vdwg.mxu0
    %v477 = vrot.slane %v472, 4
    %v478 = vadd.f32 %v472, %v477
    %v479 = vrot.slane %v478, 2
    %v480 = vadd.f32 %v478, %v479
    %v481 = vrot.slane %v480, 1
    %v482 = vadd.f32 %v480, %v481
    %v483 = vmul.f32 %v482, %v201
    %v484 = vmul.f32 %v472, %v472
    %v485 = vrot.slane %v484, 4
    %v486 = vadd.f32 %v484, %v485
    %v487 = vrot.slane %v486, 2
    %v488 = vadd.f32 %v486, %v487
    %v489 = vrot.slane %v488, 1
    %v490 = vadd.f32 %v488, %v489
    %v491 = vmul.f32 %v490, %v201
    %v492 = vmul.f32 %v483, %v483
    %v493 = vsub.f32 %v491, %v492
    %v494 = vmax.f32 %v493, 0.0
    %v495 = vadd.f32 %v494, 1e-05
    %v496 = vrsqrt.pop %v495
    %v497 = vsub.f32 %v472, %v483
    %v498 = vpack.c.bf16 %v497, %v497
    %v499 = vmul.f32 %v340, %v496
    %v500 = vpack.c.bf16 %v499, %v499
    %v501 = vpack.c.bf16 %v340, %v340
    %v503 = vpack.i.b16 %v500, %v500
    %v505 = vlaneseq
    %v506 = vshrl.u32 %v505, 7
    %v507 = vsub.s32 0, %v506
    %v508 = vrot.slane %v503, %v507
    %v509 = vmul.bf16 %v498, %v508
    %v511 = vshrl.u32 %v501, 16
    %v512 = vpack.i.b16 %v511, %v511
    %v514 = vlaneseq
    %v515 = vshrl.u32 %v514, 7
    %v516 = vsub.s32 0, %v515
    %v517 = vrot.slane %v512, %v516
    %v518 = vadd.bf16 %v509, %v517
    %v519 = vmax.bf16 %v518, 0
    %v520 = vld [vmem:[#allocation8] sm:$0xf]
    %v521 = vld [vmem:[#allocation8 + $0x4] sm:$0xf]
    %v522 = vld [vmem:[#allocation8 + $0x8] sm:$0xf]
    %v523 = vld [vmem:[#allocation8 + $0xc] sm:$0xf]
    %v524 = vld [vmem:[#allocation8 + $0x10] sm:$0xf]
    %v525 = vld [vmem:[#allocation8 + $0x14] sm:$0xf]
    %v526 = vld [vmem:[#allocation8 + $0x18] sm:$0xf]
    %v527 = vld [vmem:[#allocation8 + $0x1c] sm:$0xf]
    %v528 = vld [vmem:[#allocation8 + $0x20] sm:$0xf]
    %v529 = vld [vmem:[#allocation8 + $0x24] sm:$0xf]
    %v530 = vld [vmem:[#allocation8 + $0x28] sm:$0xf]
    %v531 = vld [vmem:[#allocation8 + $0x2c] sm:$0xf]
    %v532 = vld [vmem:[#allocation8 + $0x30] sm:$0xf]
    %v533 = vld [vmem:[#allocation8 + $0x34] sm:$0xf]
    %v534 = vld [vmem:[#allocation8 + $0x38] sm:$0xf]
    %v535 = vld [vmem:[#allocation8 + $0x3c] sm:$0xf]
    %v536 = vld [vmem:[%s6] sm:$0x3]
    %v553 = vunpack.c.l.b16 %v520
    %v554 = vunpack.c.l.b16 %v521
    %v555 = vunpack.c.l.b16 %v522
    %v556 = vunpack.c.l.b16 %v523
    %v557 = vunpack.c.l.b16 %v524
    %v558 = vunpack.c.l.b16 %v525
    %v559 = vunpack.c.l.b16 %v526
    %v560 = vunpack.c.l.b16 %v527
    %v561 = vunpack.c.l.b16 %v528
    %v562 = vunpack.c.l.b16 %v529
    %v563 = vunpack.c.l.b16 %v530
    %v564 = vunpack.c.l.b16 %v531
    %v565 = vunpack.c.l.b16 %v532
    %v566 = vunpack.c.l.b16 %v533
    %v567 = vunpack.c.l.b16 %v534
    %v568 = vunpack.c.l.b16 %v535
    %v569 = vpack.c.b16 %v554, %v553
    %v570 = vpack.c.b16 %v556, %v555
    %v571 = vpack.c.b16 %v558, %v557
    %v572 = vpack.c.b16 %v560, %v559
    %v573 = vpack.c.b16 %v562, %v561
    %v574 = vpack.c.b16 %v564, %v563
    %v575 = vpack.c.b16 %v566, %v565
    %v576 = vpack.c.b16 %v568, %v567
    %585 = vmatprep.subr.bf16.mxu0 0
    %586 = vmatpush1.bf16.msra.mxu0 %v569
    %587 = vmatprep.subr.bf16.mxu0 0
    %588 = vmatpush1.bf16.msra.mxu0 %v570
    %589 = vmatprep.subr.bf16.mxu0 0
    %590 = vmatpush1.bf16.msra.mxu0 %v571
    %591 = vmatprep.subr.bf16.mxu0 0
    %592 = vmatpush1.bf16.msra.mxu0 %v572
    %593 = vmatprep.subr.bf16.mxu0 0
    %594 = vmatpush1.bf16.msra.mxu0 %v573
    %595 = vmatprep.subr.bf16.mxu0 0
    %596 = vmatpush1.bf16.msra.mxu0 %v574
    %597 = vmatprep.subr.bf16.mxu0 0
    %598 = vmatpush1.bf16.msra.mxu0 %v575
    %599 = vmatprep.subr.bf16.mxu0 0
    %600 = vmatpush1.bf16.msra.mxu0 %v576
    %601 = vmatprep.subr.bf16.mxu0 0
    %602 = vmatpush1.bf16.msra.mxu0 0
    %603 = vmatprep.subr.bf16.mxu0 0
    %604 = vmatpush1.bf16.msra.mxu0 0
    %605 = vmatprep.subr.bf16.mxu0 0
    %606 = vmatpush1.bf16.msra.mxu0 0
    %607 = vmatprep.subr.bf16.mxu0 0
    %608 = vmatpush1.bf16.msra.mxu0 0
    %609 = vmatprep.subr.bf16.mxu0 0
    %610 = vmatpush1.bf16.msra.mxu0 0
    %611 = vmatprep.subr.bf16.mxu0 0
    %612 = vmatpush1.bf16.msra.mxu0 0
    %613 = vmatprep.subr.bf16.mxu0 0
    %614 = vmatpush1.bf16.msra.mxu0 0
    %615 = vmatprep.subr.bf16.mxu0 0
    %616 = vmatpush1.bf16.msra.mxu0 0
    %617 = vmatprep.mubr.bf16.mxu0 0
    %618 = vmatmul.mubr.bf16.gmra.mrb[0].mxu0 %v519
    %v619 = vpop.f32.mrb[0].mxu0
    %v620 = vadd.f32 0.0, %v619
    %v621 = vpop.f32.mrb[0].mxu0
    %v622 = vpop.f32.mrb[0].mxu0
    %v623 = vpop.f32.mrb[0].mxu0
    %624 = vdwg.mxu0
    %v625 = vrot.slane %v620, 4
    %v626 = vadd.f32 %v620, %v625
    %v627 = vrot.slane %v626, 2
    %v628 = vadd.f32 %v626, %v627
    %v629 = vrot.slane %v628, 1
    %v630 = vadd.f32 %v628, %v629
    %v631 = vmul.f32 %v630, %v201
    %v632 = vmul.f32 %v620, %v620
    %v633 = vrot.slane %v632, 4
    %v634 = vadd.f32 %v632, %v633
    %v635 = vrot.slane %v634, 2
    %v636 = vadd.f32 %v634, %v635
    %v637 = vrot.slane %v636, 1
    %v638 = vadd.f32 %v636, %v637
    %v639 = vmul.f32 %v638, %v201
    %v640 = vmul.f32 %v631, %v631
    %v641 = vsub.f32 %v639, %v640
    %v642 = vmax.f32 %v641, 0.0
    %v643 = vadd.f32 %v642, 1e-05
    %v644 = vrsqrt.pop %v643
    %v645 = vsub.f32 %v620, %v631
    %v646 = vpack.c.bf16 %v645, %v645
    %v647 = vmul.f32 %v536, %v644
    %v648 = vpack.c.bf16 %v647, %v647
    %v649 = vpack.c.bf16 %v536, %v536
    %v651 = vpack.i.b16 %v648, %v648
    %v653 = vlaneseq
    %v654 = vshrl.u32 %v653, 7
    %v655 = vsub.s32 0, %v654
    %v656 = vrot.slane %v651, %v655
    %v657 = vmul.bf16 %v646, %v656
    %v659 = vshrl.u32 %v649, 16
    %v660 = vpack.i.b16 %v659, %v659
    %v662 = vlaneseq
    %v663 = vshrl.u32 %v662, 7
    %v664 = vsub.s32 0, %v663
    %v665 = vrot.slane %v660, %v664
    %v666 = vadd.bf16 %v657, %v665
    %v667 = vmax.bf16 %v666, 0
    %v668 = vld [vmem:[#allocation10] sm:$0xf]
    %v669 = vld [vmem:[#allocation10 + $0x4] sm:$0xf]
    %v670 = vld [vmem:[#allocation10 + $0x8] sm:$0xf]
    %v671 = vld [vmem:[#allocation10 + $0xc] sm:$0xf]
    %v672 = vld [vmem:[#allocation10 + $0x10] sm:$0xf]
    %v673 = vld [vmem:[#allocation10 + $0x14] sm:$0xf]
    %v674 = vld [vmem:[#allocation10 + $0x18] sm:$0xf]
    %v675 = vld [vmem:[#allocation10 + $0x1c] sm:$0xf]
    %v676 = vld [vmem:[#allocation10 + $0x20] sm:$0xf]
    %v677 = vld [vmem:[#allocation10 + $0x24] sm:$0xf]
    %v678 = vld [vmem:[#allocation10 + $0x28] sm:$0xf]
    %v679 = vld [vmem:[#allocation10 + $0x2c] sm:$0xf]
    %v680 = vld [vmem:[#allocation10 + $0x30] sm:$0xf]
    %v681 = vld [vmem:[#allocation10 + $0x34] sm:$0xf]
    %v682 = vld [vmem:[#allocation10 + $0x38] sm:$0xf]
    %v683 = vld [vmem:[#allocation10 + $0x3c] sm:$0xf]
    %v684 = vld [vmem:[%s8] sm:$0x3]
    %v701 = vunpack.c.l.b16 %v668
    %v702 = vunpack.c.l.b16 %v669
    %v703 = vunpack.c.l.b16 %v670
    %v704 = vunpack.c.l.b16 %v671
    %v705 = vunpack.c.l.b16 %v672
    %v706 = vunpack.c.l.b16 %v673
    %v707 = vunpack.c.l.b16 %v674
    %v708 = vunpack.c.l.b16 %v675
    %v709 = vunpack.c.l.b16 %v676
    %v710 = vunpack.c.l.b16 %v677
    %v711 = vunpack.c.l.b16 %v678
    %v712 = vunpack.c.l.b16 %v679
    %v713 = vunpack.c.l.b16 %v680
    %v714 = vunpack.c.l.b16 %v681
    %v715 = vunpack.c.l.b16 %v682
    %v716 = vunpack.c.l.b16 %v683
    %v717 = vpack.c.b16 %v702, %v701
    %v718 = vpack.c.b16 %v704, %v703
    %v719 = vpack.c.b16 %v706, %v705
    %v720 = vpack.c.b16 %v708, %v707
    %v721 = vpack.c.b16 %v710, %v709
    %v722 = vpack.c.b16 %v712, %v711
    %v723 = vpack.c.b16 %v714, %v713
    %v724 = vpack.c.b16 %v716, %v715
    %733 = vmatprep.subr.bf16.mxu0 0
    %734 = vmatpush1.bf16.msra.mxu0 %v717
    %735 = vmatprep.subr.bf16.mxu0 0
    %736 = vmatpush1.bf16.msra.mxu0 %v718
    %737 = vmatprep.subr.bf16.mxu0 0
    %738 = vmatpush1.bf16.msra.mxu0 %v719
    %739 = vmatprep.subr.bf16.mxu0 0
    %740 = vmatpush1.bf16.msra.mxu0 %v720
    %741 = vmatprep.subr.bf16.mxu0 0
    %742 = vmatpush1.bf16.msra.mxu0 %v721
    %743 = vmatprep.subr.bf16.mxu0 0
    %744 = vmatpush1.bf16.msra.mxu0 %v722
    %745 = vmatprep.subr.bf16.mxu0 0
    %746 = vmatpush1.bf16.msra.mxu0 %v723
    %747 = vmatprep.subr.bf16.mxu0 0
    %748 = vmatpush1.bf16.msra.mxu0 %v724
    %749 = vmatprep.subr.bf16.mxu0 0
    %750 = vmatpush1.bf16.msra.mxu0 0
    %751 = vmatprep.subr.bf16.mxu0 0
    %752 = vmatpush1.bf16.msra.mxu0 0
    %753 = vmatprep.subr.bf16.mxu0 0
    %754 = vmatpush1.bf16.msra.mxu0 0
    %755 = vmatprep.subr.bf16.mxu0 0
    %756 = vmatpush1.bf16.msra.mxu0 0
    %757 = vmatprep.subr.bf16.mxu0 0
    %758 = vmatpush1.bf16.msra.mxu0 0
    %759 = vmatprep.subr.bf16.mxu0 0
    %760 = vmatpush1.bf16.msra.mxu0 0
    %761 = vmatprep.subr.bf16.mxu0 0
    %762 = vmatpush1.bf16.msra.mxu0 0
    %763 = vmatprep.subr.bf16.mxu0 0
    %764 = vmatpush1.bf16.msra.mxu0 0
    %765 = vmatprep.mubr.bf16.mxu0 0
    %766 = vmatmul.mubr.bf16.gmra.mrb[0].mxu0 %v667
    %v767 = vpop.f32.mrb[0].mxu0
    %v768 = vadd.f32 0.0, %v767
    %v769 = vpop.f32.mrb[0].mxu0
    %v770 = vpop.f32.mrb[0].mxu0
    %v771 = vpop.f32.mrb[0].mxu0
    %772 = vdwg.mxu0
    %v773 = vrot.slane %v768, 4
    %v774 = vadd.f32 %v768, %v773
    %v775 = vrot.slane %v774, 2
    %v776 = vadd.f32 %v774, %v775
    %v777 = vrot.slane %v776, 1
    %v778 = vadd.f32 %v776, %v777
    %v779 = vmul.f32 %v778, %v201
    %v780 = vmul.f32 %v768, %v768
    %v781 = vrot.slane %v780, 4
    %v782 = vadd.f32 %v780, %v781
    %v783 = vrot.slane %v782, 2
    %v784 = vadd.f32 %v782, %v783
    %v785 = vrot.slane %v784, 1
    %v786 = vadd.f32 %v784, %v785
    %v787 = vmul.f32 %v786, %v201
    %v788 = vmul.f32 %v779, %v779
    %v789 = vsub.f32 %v787, %v788
    %v790 = vmax.f32 %v789, 0.0
    %v791 = vadd.f32 %v790, 1e-05
    %v792 = vrsqrt.pop %v791
    %v793 = vsub.f32 %v768, %v779
    %v794 = vpack.c.bf16 %v793, %v793
    %v795 = vmul.f32 %v684, %v792
    %v796 = vpack.c.bf16 %v795, %v795
    %v797 = vpack.c.bf16 %v684, %v684
    %v799 = vpack.i.b16 %v796, %v796
    %v801 = vlaneseq
    %v802 = vshrl.u32 %v801, 7
    %v803 = vsub.s32 0, %v802
    %v804 = vrot.slane %v799, %v803
    %v805 = vmul.bf16 %v794, %v804
    %v807 = vshrl.u32 %v797, 16
    %v808 = vpack.i.b16 %v807, %v807
    %v810 = vlaneseq
    %v811 = vshrl.u32 %v810, 7
    %v812 = vsub.s32 0, %v811
    %v813 = vrot.slane %v808, %v812
    %v814 = vadd.bf16 %v805, %v813
    %v815 = vmax.bf16 %v814, 0
    %v816 = vld [vmem:[#allocation11] sm:$0xf]
    %v817 = vld [vmem:[#allocation11 + $0x4] sm:$0xf]
    %v818 = vld [vmem:[#allocation11 + $0x8] sm:$0xf]
    %v819 = vld [vmem:[#allocation11 + $0xc] sm:$0xf]
    %v820 = vld [vmem:[#allocation11 + $0x10] sm:$0xf]
    %v821 = vld [vmem:[#allocation11 + $0x14] sm:$0xf]
    %v822 = vld [vmem:[#allocation11 + $0x18] sm:$0xf]
    %v823 = vld [vmem:[#allocation11 + $0x1c] sm:$0xf]
    %v824 = vld [vmem:[#allocation11 + $0x20] sm:$0xf]
    %v825 = vld [vmem:[#allocation11 + $0x24] sm:$0xf]
    %v826 = vld [vmem:[#allocation11 + $0x28] sm:$0xf]
    %v827 = vld [vmem:[#allocation11 + $0x2c] sm:$0xf]
    %v828 = vld [vmem:[#allocation11 + $0x30] sm:$0xf]
    %v829 = vld [vmem:[#allocation11 + $0x34] sm:$0xf]
    %v830 = vld [vmem:[#allocation11 + $0x38] sm:$0xf]
    %v831 = vld [vmem:[#allocation11 + $0x3c] sm:$0xf]
    %v848 = vunpack.c.l.b16 %v816
    %v849 = vunpack.c.l.b16 %v817
    %v850 = vunpack.c.l.b16 %v818
    %v851 = vunpack.c.l.b16 %v819
    %v852 = vunpack.c.l.b16 %v820
    %v853 = vunpack.c.l.b16 %v821
    %v854 = vunpack.c.l.b16 %v822
    %v855 = vunpack.c.l.b16 %v823
    %v856 = vunpack.c.l.b16 %v824
    %v857 = vunpack.c.l.b16 %v825
    %v858 = vunpack.c.l.b16 %v826
    %v859 = vunpack.c.l.b16 %v827
    %v860 = vunpack.c.l.b16 %v828
    %v861 = vunpack.c.l.b16 %v829
    %v862 = vunpack.c.l.b16 %v830
    %v863 = vunpack.c.l.b16 %v831
    %v864 = vpack.c.b16 %v849, %v848
    %v865 = vpack.c.b16 %v851, %v850
    %v866 = vpack.c.b16 %v853, %v852
    %v867 = vpack.c.b16 %v855, %v854
    %v868 = vpack.c.b16 %v857, %v856
    %v869 = vpack.c.b16 %v859, %v858
    %v870 = vpack.c.b16 %v861, %v860
    %v871 = vpack.c.b16 %v863, %v862
    %880 = vmatprep.subr.bf16.mxu0 0
    %881 = vmatpush1.bf16.msra.mxu0 %v864
    %882 = vmatprep.subr.bf16.mxu0 0
    %883 = vmatpush1.bf16.msra.mxu0 %v865
    %884 = vmatprep.subr.bf16.mxu0 0
    %885 = vmatpush1.bf16.msra.mxu0 %v866
    %886 = vmatprep.subr.bf16.mxu0 0
    %887 = vmatpush1.bf16.msra.mxu0 %v867
    %888 = vmatprep.subr.bf16.mxu0 0
    %889 = vmatpush1.bf16.msra.mxu0 %v868
    %890 = vmatprep.subr.bf16.mxu0 0
    %891 = vmatpush1.bf16.msra.mxu0 %v869
    %892 = vmatprep.subr.bf16.mxu0 0
    %893 = vmatpush1.bf16.msra.mxu0 %v870
    %894 = vmatprep.subr.bf16.mxu0 0
    %895 = vmatpush1.bf16.msra.mxu0 %v871
    %896 = vmatprep.subr.bf16.mxu0 0
    %897 = vmatpush1.bf16.msra.mxu0 0
    %898 = vmatprep.subr.bf16.mxu0 0
    %899 = vmatpush1.bf16.msra.mxu0 0
    %900 = vmatprep.subr.bf16.mxu0 0
    %901 = vmatpush1.bf16.msra.mxu0 0
    %902 = vmatprep.subr.bf16.mxu0 0
    %903 = vmatpush1.bf16.msra.mxu0 0
    %904 = vmatprep.subr.bf16.mxu0 0
    %905 = vmatpush1.bf16.msra.mxu0 0
    %906 = vmatprep.subr.bf16.mxu0 0
    %907 = vmatpush1.bf16.msra.mxu0 0
    %908 = vmatprep.subr.bf16.mxu0 0
    %909 = vmatpush1.bf16.msra.mxu0 0
    %910 = vmatprep.subr.bf16.mxu0 0
    %911 = vmatpush1.bf16.msra.mxu0 0
    %912 = vmatprep.mubr.bf16.mxu0 0
    %913 = vmatmul.mubr.bf16.gmra.mrb[0].mxu0 %v815
    %v914 = vpop.f32.mrb[0].mxu0
    %v915 = vadd.f32 0.0, %v914
    %v916 = vpop.f32.mrb[0].mxu0
    %v917 = vpop.f32.mrb[0].mxu0
    %v918 = vpop.f32.mrb[0].mxu0
    %919 = vdwg.mxu0
    %920 = vst [vmem:[#allocation13] sm:$0xff] %v915
    // Predicated region
    $region66: #{mlp_forward.1} parent=1 // pred_check
      _
    $region67: #{mlp_forward.1} parent=1 // pred_check_branch
      %922 = sbr.rel (0) target = $region69
    $region68: #{mlp_forward.1} parent=1 // pred_region
      %s924 = ssub.s32 128, 128
      %925 = vsyncadd [#allocation4], %s924
      %s927 = sshll.u32 [#allocation13], 4
      %s928 = int_to_ptr.vmem [resolvable:$true] %s927
      %930 = dma.vmem_to_hbm [thread:$0]  %s928, 128, %s10, [#allocation4]
    $region69: #{mlp_forward.1} parent=1 // pred_fallthru
      _
    // Predicated region
    $region70: #{mlp_forward.1} parent=1 // pred_check
      _
    $region71: #{mlp_forward.1} parent=1 // pred_check_branch
      %932 = sbr.rel (0) target = $region73
    $region72: #{mlp_forward.1} parent=1 // pred_region
      %933 = dma.done [#allocation4], 128
    $region73: #{mlp_forward.1} parent=1 // pred_fallthru
      _
    %934 = vsyncpa [#allocation3], 1
    %935 = vsyncpa [#allocation6], 1
    %936 = vsyncpa [#allocation9], 1
    %937 = vsyncpa [#allocation12], 1
    %938 = vsyncpa [#allocation4], 1

</llo_original>
